<compile_context>
chip_gen: v5e
topology: v5e:2x2
jax: 0.10.0
libtpu: 0.0.40
codegen_flags: <defaults>
</compile_context>

<pallas_src>
import functools
import math

import jax
import jax.numpy as jnp
from jax import lax
from jax.experimental import pallas as pl
from jax.experimental.pallas import tpu as pltpu

EPS = 1e-12                      # torch.nn.functional.normalize default

_LANES = 128
_SUBLANES = 8
_TARGET_TILE_BYTES = 2 << 20     # ~2 MiB input tile per grid step
_SINGLE_BLOCK_BYTES = 256 << 10  # below this, one full block is cheapest
_MAX_SLAB_BYTES = 6 << 20        # per-(D,B) slab limit for the sublane path
_MIN_STEPS = 4                   # balanced grid for v7x's two TensorCores


def _cdiv(a, b):
    return -(-a // b)


def _round_up(x, m):
    return _cdiv(x, m) * m


def _choose_tile_rows(m, row_bytes):
    """Rows per grid step: ~_TARGET_TILE_BYTES per input tile (multiple of 8),
    preferring an even number of >= _MIN_STEPS roughly equal steps so v7x's two
    TensorCores get balanced work. Returns either a multiple of 8 or m itself
    (full-dim blocks are always legal)."""
    if m <= _SUBLANES or m * row_bytes <= _SINGLE_BLOCK_BYTES:
        return m
    tm_cap = max(_SUBLANES,
                 (_TARGET_TILE_BYTES // max(row_bytes, 1)) // _SUBLANES * _SUBLANES)
    steps = max(_MIN_STEPS, _cdiv(m, tm_cap))
    if steps % 2:
        steps += 1
    tm = min(tm_cap, _round_up(_cdiv(m, steps), _SUBLANES))
    return max(_SUBLANES, min(tm, m))


def _vmem_limit(tile_bytes):
    """Double-buffered in+out footprint plus margin, clamped so it never asks
    for v7x's entire 64 MiB physical VMEM."""
    needed = 4 * tile_bytes + (2 << 20)
    return int(min(48 << 20, max(16 << 20, needed)))


# ----------------------------------------------------------------------------
# Kernels
# ----------------------------------------------------------------------------

def _l2norm_lane_kernel(x_ref, o_ref):
    """(tm, D) block; L2-normalize each row along the lane (last) dim."""
    eps2 = jnp.float32(EPS * EPS)
    x = x_ref[...].astype(jnp.float32)                 # VPU math in f32
    sq = jnp.sum(x * x, axis=-1, keepdims=True)        # XLU lane reduce
    # 1/max(||x||, eps) == rsqrt(max(||x||^2, eps^2)); rsqrt -> EUP slot.
    inv = lax.rsqrt(jnp.maximum(sq, eps2))
    o_ref[...] = (x * inv).astype(o_ref.dtype)


def _l2norm_packed_kernel(x_ref, o_ref, *, k, d):
    """(tm, k*d) lane-dense block holding k independent length-d rows per
    128-lane group; per-group lane reduce.  HBM DMA in/out stays lane-dense."""
    eps2 = jnp.float32(EPS * EPS)
    x = x_ref[...].astype(jnp.float32)
    for g in range(k):                                  # k is small & static
        xg = x[:, g * d:(g + 1) * d]
        sq = jnp.sum(xg * xg, axis=-1, keepdims=True)
        inv = lax.rsqrt(jnp.maximum(sq, eps2))
        o_ref[:, g * d:(g + 1) * d] = (xg * inv).astype(o_ref.dtype)


def _l2norm_sublane_kernel(x_ref, o_ref):
    """(ta, D, B) block; L2-normalize along the middle (sublane) axis.
    Used when the reduced dim is not minor — avoids two full-tensor
    transposes (3x HBM traffic) in the wrapper."""
    eps2 = jnp.float32(EPS * EPS)
    x = x_ref[...].astype(jnp.float32)
    sq = jnp.sum(x * x, axis=1, keepdims=True)          # sublane reduce
    inv = lax.rsqrt(jnp.maximum(sq, eps2))
    o_ref[...] = (x * inv).astype(o_ref.dtype)


# ----------------------------------------------------------------------------
# Wrappers
# ----------------------------------------------------------------------------

def _normalize_last(x2):
    """x2: (M, D); L2-normalize each row along the last dim."""
    M, D = x2.shape
    itemsize = jnp.dtype(x2.dtype).itemsize

    # Lane-pack small D: k rows per 128-lane group -> lane-dense DMA/stores.
    if 0 < D < _LANES and _LANES % D == 0:
        k = _LANES // D
        if k <= 16 and M % k == 0:
            Mg = M // k
            xp = x2.reshape(Mg, k * D)
            row_bytes = k * D * itemsize
            tm = _choose_tile_rows(Mg, row_bytes)
            out = pl.pallas_call(
                functools.partial(_l2norm_packed_kernel, k=k, d=D),
                out_shape=jax.ShapeDtypeStruct((Mg, k * D), x2.dtype),
                grid=(_cdiv(Mg, tm),),
                in_specs=[pl.BlockSpec((tm, k * D), lambda i: (i, 0))],
                out_specs=pl.BlockSpec((tm, k * D), lambda i: (i, 0)),
                compiler_params=pltpu.CompilerParams(
                    dimension_semantics=("parallel",),
                    vmem_limit_bytes=_vmem_limit(tm * row_bytes)),
            )(xp)
            return out.reshape(M, D)

    row_bytes = D * itemsize
    tm = _choose_tile_rows(M, row_bytes)
    return pl.pallas_call(
        _l2norm_lane_kernel,
        out_shape=jax.ShapeDtypeStruct((M, D), x2.dtype),
        grid=(_cdiv(M, tm),),
        in_specs=[pl.BlockSpec((tm, D), lambda i: (i, 0))],
        out_specs=pl.BlockSpec((tm, D), lambda i: (i, 0)),
        compiler_params=pltpu.CompilerParams(
            dimension_semantics=("parallel",),
            vmem_limit_bytes=_vmem_limit(tm * row_bytes)),
    )(x2)


def l2norm(t, dim=-1):
    """Pallas equivalent of F.normalize(t, p=2, dim=dim) (L2Norm.forward)."""
    ndim = t.ndim
    if ndim == 0:
        raise ValueError("l2norm requires at least a 1-D input")
    dim = dim % ndim
    shape = t.shape
    D = shape[dim]
    itemsize = jnp.dtype(t.dtype).itemsize

    # Fast path: reduce along the minor (lane) dim.
    if dim == ndim - 1:
        M = math.prod(shape[:-1])
        out = _normalize_last(t.reshape(M, D))
        return out.reshape(shape)

    # Reduced dim is not minor: keep it second-minor and reduce along
    # sublanes, avoiding two whole-tensor transposes on a BW-bound op.
    A = math.prod(shape[:dim])
    B = math.prod(shape[dim + 1:])
    slab_bytes = D * B * itemsize
    if slab_bytes <= _MAX_SLAB_BYTES:
        x3 = t.reshape(A, D, B)
        ta = _choose_tile_rows(A, slab_bytes)
        out = pl.pallas_call(
            _l2norm_sublane_kernel,
            out_shape=jax.ShapeDtypeStruct((A, D, B), t.dtype),
            grid=(_cdiv(A, ta),),
            in_specs=[pl.BlockSpec((ta, D, B), lambda i: (i, 0, 0))],
            out_specs=pl.BlockSpec((ta, D, B), lambda i: (i, 0, 0)),
            compiler_params=pltpu.CompilerParams(
                dimension_semantics=("parallel",),
                vmem_limit_bytes=_vmem_limit(ta * slab_bytes)),
        )(x3)
        return out.reshape(shape)

    # Fallback for huge D*B slabs: bring `dim` minor (layout plumbing only).
    perm = list(range(ndim))
    perm[dim], perm[-1] = perm[-1], perm[dim]
    tp = jnp.transpose(t, perm)
    M = math.prod(tp.shape[:-1])
    out = _normalize_last(tp.reshape(M, D)).reshape(tp.shape)
    return jnp.transpose(out, perm)


def _reference(t, dim=-1):
    """Pure-JAX reference mirroring F.normalize(t, p=2, dim=dim)."""
    x = t.astype(jnp.float32)
    n = jnp.sqrt(jnp.sum(x * x, axis=dim, keepdims=True))
    return (x / jnp.maximum(n, EPS)).astype(t.dtype)


if __name__ == "__main__":
    key = jax.random.PRNGKey(0)
    k1, k2, k3 = jax.random.split(key, 3)

    # Module-implied small shape (batch=2, seq=8, hidden=32), dim=-1.
    # D=32 -> lane-packed path (4 rows per 128-lane group).
    t1 = jax.random.normal(k1, (2, 8, 32), jnp.float32)
    y1 = jax.block_until_ready(l2norm(t1))
    r1 = _reference(t1)
    assert y1.shape == t1.shape, y1.shape
    assert jnp.allclose(y1, r1, atol=1e-5, rtol=1e-5), float(jnp.max(jnp.abs(y1 - r1)))

    # Larger dim=-1 case: multi-step pipelined grid with a partial last block
    # (M=1040 rows, tm=264 -> 4 grid steps).
    t2 = jax.random.normal(k2, (4, 260, 128), jnp.float32)
    y2 = jax.block_until_ready(l2norm(t2))
    r2 = _reference(t2)
    assert jnp.allclose(y2, r2, atol=1e-5, rtol=1e-5), float(jnp.max(jnp.abs(y2 - r2)))

    # Non-minor dim (channels-first image, dim=1): sublane-reduction path,
    # no wrapper transposes.
    t3 = jax.random.normal(k3, (2, 4, 16, 16), jnp.float32)
    y3 = jax.block_until_ready(l2norm(t3, dim=1))
    r3 = _reference(t3, dim=1)
    assert jnp.allclose(y3, r3, atol=1e-5, rtol=1e-5), float(jnp.max(jnp.abs(y3 - r3)))

    print("KERNEL_OK")
</pallas_src>

<mosaic_0001>
module attributes {stable_mosaic.version = 11 : i64} {
  func.func @_l2norm_packed_kernel(%arg0: i32, %arg1: memref<4x128xf32, #tpu.memory_space<vmem>>, %arg2: memref<4x128xf32, #tpu.memory_space<vmem>>) attributes {dimension_semantics = [#tpu.dimension_semantics<parallel>], iteration_bounds = array<i64: 1>, scalar_prefetch = 0 : i64, scratch_operands = 0 : i64, tpu.core_type = #tpu.core_type<tc>, window_params = [{transform_indices = @transform_0, window_bounds = array<i64: 4, 128>}, {transform_indices = @transform_1, window_bounds = array<i64: 4, 128>}]} {
    %c0 = arith.constant 0 : index
    %c0_0 = arith.constant 0 : index
    %0 = vector.load %arg1[%c0, %c0_0] : memref<4x128xf32, #tpu.memory_space<vmem>>, vector<4x128xf32>
    %1 = vector.extract_strided_slice %0 {offsets = [0, 0], sizes = [4, 32], strides = [1, 1]} : vector<4x128xf32> to vector<4x32xf32>
    %2 = arith.mulf %1, %1 : vector<4x32xf32>
    %cst = arith.constant dense<0.000000e+00> : vector<4xf32>
    %3 = vector.multi_reduction <add>, %2, %cst [1] : vector<4x32xf32> to vector<4xf32>
    %4 = vector.shape_cast %3 : vector<4xf32> to vector<4x1xf32>
    %cst_1 = arith.constant 1.000000e-24 : f32
    %5 = vector.broadcast %cst_1 : f32 to vector<4x1xf32>
    %6 = arith.maximumf %4, %5 : vector<4x1xf32>
    %7 = math.rsqrt %6 : vector<4x1xf32>
    %8 = vector.broadcast %7 : vector<4x1xf32> to vector<4x32xf32>
    %9 = arith.mulf %1, %8 : vector<4x32xf32>
    %c0_2 = arith.constant 0 : index
    %c0_3 = arith.constant 0 : index
    %10 = vector.load %arg2[%c0_2, %c0_3] : memref<4x128xf32, #tpu.memory_space<vmem>>, vector<4x32xf32>
    tpu.vector_store %arg2[%c0_2, %c0_3], %9 {strides = array<i32>} : memref<4x128xf32, #tpu.memory_space<vmem>>, vector<4x32xf32>,
    %11 = vector.extract_strided_slice %0 {offsets = [0, 32], sizes = [4, 32], strides = [1, 1]} : vector<4x128xf32> to vector<4x32xf32>
    %12 = arith.mulf %11, %11 : vector<4x32xf32>
    %cst_4 = arith.constant dense<0.000000e+00> : vector<4xf32>
    %13 = vector.multi_reduction <add>, %12, %cst_4 [1] : vector<4x32xf32> to vector<4xf32>
    %14 = vector.shape_cast %13 : vector<4xf32> to vector<4x1xf32>
    %cst_5 = arith.constant 1.000000e-24 : f32
    %15 = vector.broadcast %cst_5 : f32 to vector<4x1xf32>
    %16 = arith.maximumf %14, %15 : vector<4x1xf32>
    %17 = math.rsqrt %16 : vector<4x1xf32>
    %18 = vector.broadcast %17 : vector<4x1xf32> to vector<4x32xf32>
    %19 = arith.mulf %11, %18 : vector<4x32xf32>
    %c0_6 = arith.constant 0 : index
    %c32 = arith.constant 32 : index
    %20 = vector.load %arg2[%c0_6, %c32] : memref<4x128xf32, #tpu.memory_space<vmem>>, vector<4x32xf32>
    tpu.vector_store %arg2[%c0_6, %c32], %19 {strides = array<i32>} : memref<4x128xf32, #tpu.memory_space<vmem>>, vector<4x32xf32>,
    %21 = vector.extract_strided_slice %0 {offsets = [0, 64], sizes = [4, 32], strides = [1, 1]} : vector<4x128xf32> to vector<4x32xf32>
    %22 = arith.mulf %21, %21 : vector<4x32xf32>
    %cst_7 = arith.constant dense<0.000000e+00> : vector<4xf32>
    %23 = vector.multi_reduction <add>, %22, %cst_7 [1] : vector<4x32xf32> to vector<4xf32>
    %24 = vector.shape_cast %23 : vector<4xf32> to vector<4x1xf32>
    %cst_8 = arith.constant 1.000000e-24 : f32
    %25 = vector.broadcast %cst_8 : f32 to vector<4x1xf32>
    %26 = arith.maximumf %24, %25 : vector<4x1xf32>
    %27 = math.rsqrt %26 : vector<4x1xf32>
    %28 = vector.broadcast %27 : vector<4x1xf32> to vector<4x32xf32>
    %29 = arith.mulf %21, %28 : vector<4x32xf32>
    %c0_9 = arith.constant 0 : index
    %c64 = arith.constant 64 : index
    %30 = vector.load %arg2[%c0_9, %c64] : memref<4x128xf32, #tpu.memory_space<vmem>>, vector<4x32xf32>
    tpu.vector_store %arg2[%c0_9, %c64], %29 {strides = array<i32>} : memref<4x128xf32, #tpu.memory_space<vmem>>, vector<4x32xf32>,
    %31 = vector.extract_strided_slice %0 {offsets = [0, 96], sizes = [4, 32], strides = [1, 1]} : vector<4x128xf32> to vector<4x32xf32>
    %32 = arith.mulf %31, %31 : vector<4x32xf32>
    %cst_10 = arith.constant dense<0.000000e+00> : vector<4xf32>
    %33 = vector.multi_reduction <add>, %32, %cst_10 [1] : vector<4x32xf32> to vector<4xf32>
    %34 = vector.shape_cast %33 : vector<4xf32> to vector<4x1xf32>
    %cst_11 = arith.constant 1.000000e-24 : f32
    %35 = vector.broadcast %cst_11 : f32 to vector<4x1xf32>
    %36 = arith.maximumf %34, %35 : vector<4x1xf32>
    %37 = math.rsqrt %36 : vector<4x1xf32>
    %38 = vector.broadcast %37 : vector<4x1xf32> to vector<4x32xf32>
    %39 = arith.mulf %31, %38 : vector<4x32xf32>
    %c0_12 = arith.constant 0 : index
    %c96 = arith.constant 96 : index
    %40 = vector.load %arg2[%c0_12, %c96] : memref<4x128xf32, #tpu.memory_space<vmem>>, vector<4x32xf32>
    tpu.vector_store %arg2[%c0_12, %c96], %39 {strides = array<i32>} : memref<4x128xf32, #tpu.memory_space<vmem>>, vector<4x32xf32>,
    return
  }
  func.func @transform_0(%arg0: i32) -> (i32, i32) {
    %c0_i32 = arith.constant 0 : i32
    %c0_i32_0 = arith.constant 0 : i32
    return %arg0, %c0_i32 : i32, i32
  }
  func.func @transform_1(%arg0: i32) -> (i32, i32) {
    %c0_i32 = arith.constant 0 : i32
    %c0_i32_0 = arith.constant 0 : i32
    return %arg0, %c0_i32 : i32, i32
  }
}

</mosaic_0001>

<llo_original>
// kernel: tpu_custom_call.1
$region0: #{tpu_custom_call.1}
  #allocation0 [shape = 'u32[]', space=smem, size = 0x4, offset = 0x4, fixed_abs, tag = 'smem constant byte address 0x4 - core index']
  #allocation1 [shape = 'u32[72,128]{1,0:T(1,128)}', space=vmem, size = 0x9000, scoped, tag = 'internal scratch']
  %s0 = inlined_call_operand.hbm [shape: f32[4,128], index: 0, kind: input, shape index: {}]
  %s1 = inlined_call_operand.hbm [shape: f32[4,128], index: 1, kind: output, shape index: {}]
  %s2 = sld [smem:[#allocation0]]
  $region18: #{tpu_custom_call.1} parent=0
    _
  %s4 = ssub.s32 1, %s2
  %s5 = scalar_select 0, %s4, %s2
  $region1: #{tpu_custom_call.1} parent=0
    #allocation2 [shape = 'u8[2048]{0}', space=vmem, size = 0x800, scoped, tag = 'input window, operand 0, single buffered']
    #allocation3 [shape = 's32[1]{0}', space=sflag, size = 0x4, scoped, tag = 'scoped memory for tpu_custom_call.1']
    #allocation4 [shape = 's32[1]{0}', space=sflag, size = 0x4, scoped, tag = 'scoped memory for tpu_custom_call.1']
    #allocation5 [shape = 'u8[2048]{0}', space=vmem, size = 0x800, scoped, tag = 'output window, operand 0, single buffered']
    %6 = vsyncpa [#allocation3], 0
    %7 = vsyncpa [#allocation4], 0
    // Predicated region
    $region2: #{tpu_custom_call.1} parent=1 // pred_check
      _
    $region3: #{tpu_custom_call.1} parent=1 // pred_check_branch
      %9 = sbr.rel (0) target = $region5
    $region4: #{tpu_custom_call.1} parent=1 // pred_region
      %11 = vsyncadd [#allocation3], 0
      %s13 = sshll.u32 %s0, 4
      %s14 = int_to_ptr.hbm [resolvable:$true] %s13
      %s15 = sshll.u32 [#allocation2], 4
      %s16 = int_to_ptr.vmem [resolvable:$true] %s15
      %18 = dma.hbm_to_vmem [thread:$0]  %s14, 64, %s16, [#allocation3]
    $region5: #{tpu_custom_call.1} parent=1 // pred_fallthru
      _
    // Predicated region
    $region6: #{tpu_custom_call.1} parent=1 // pred_check
      _
    $region7: #{tpu_custom_call.1} parent=1 // pred_check_branch
      %20 = sbr.rel (0) target = $region9
    $region8: #{tpu_custom_call.1} parent=1 // pred_region
      %22 = dma.done [#allocation3], 64
    $region9: #{tpu_custom_call.1} parent=1 // pred_fallthru
      _
    %v23 = vld [vmem:[#allocation2] sm:$0xf]
    %v24 = vmul.f32 %v23, %v23
    %vm25 = vcmask 257024
    %v26 = vsel %vm25, %v24, 0.0
    %27 = vadd.xlane.f32.xlu0 %v26
    %v28 = vpop.xlane.xlu0 %27
    %v29 = vmax.f32 %v28, 1e-24
    %v30 = vrsqrt.pop %v29
    %v31 = vmul.f32 %v30, %v29
    %v32 = vmul.f32 %v31, %v30
    %v33 = vmul.f32 0.5, %v32
    %v34 = vsub.f32 1.5, %v33
    %v35 = vmul.f32 %v30, %v34
    %vm36 = vweird.f32 %v29
    %vm37 = vweird.f32 %v30
    %vm38 = vmor %vm36, %vm37
    %v39 = vsel %vm38, %v30, %v35
    %v40 = vmul.f32 %v23, %v39
    %41 = vst.msk [vmem:[#allocation5] sm:$0xf] %vm25, %v40
    %43 = vrot.lane.b32.xlu0 %v24, 96
    %v44 = vpop.permute.xlu0 %43
    %v46 = vsel %vm25, %v44, 0.0
    %47 = vadd.xlane.f32.xlu0 %v46
    %v48 = vpop.xlane.xlu0 %47
    %v49 = vmax.f32 %v48, 1e-24
    %v50 = vrsqrt.pop %v49
    %v51 = vmul.f32 %v50, %v49
    %v52 = vmul.f32 %v51, %v50
    %v53 = vmul.f32 0.5, %v52
    %v54 = vsub.f32 1.5, %v53
    %v55 = vmul.f32 %v50, %v54
    %vm56 = vweird.f32 %v49
    %vm57 = vweird.f32 %v50
    %vm58 = vmor %vm56, %vm57
    %v59 = vsel %vm58, %v50, %v55
    %v60 = vmul.f32 %v23, %v59
    %vm61 = vcmask 519424
    %62 = vst.msk [vmem:[#allocation5] sm:$0xf] %vm61, %v60
    %63 = vrot.lane.b32.xlu0 %v24, 64
    %v64 = vpop.permute.xlu0 %63
    %v66 = vsel %vm25, %v64, 0.0
    %67 = vadd.xlane.f32.xlu0 %v66
    %v68 = vpop.xlane.xlu0 %67
    %v69 = vmax.f32 %v68, 1e-24
    %v70 = vrsqrt.pop %v69
    %v71 = vmul.f32 %v70, %v69
    %v72 = vmul.f32 %v71, %v70
    %v73 = vmul.f32 0.5, %v72
    %v74 = vsub.f32 1.5, %v73
    %v75 = vmul.f32 %v70, %v74
    %vm76 = vweird.f32 %v69
    %vm77 = vweird.f32 %v70
    %vm78 = vmor %vm76, %vm77
    %v79 = vsel %vm78, %v70, %v75
    %v80 = vmul.f32 %v23, %v79
    %vm81 = vcmask 781824
    %82 = vst.msk [vmem:[#allocation5] sm:$0xf] %vm81, %v80
    %83 = vrot.lane.b32.xlu0 %v24, 32
    %v84 = vpop.permute.xlu0 %83
    %v86 = vsel %vm25, %v84, 0.0
    %87 = vadd.xlane.f32.xlu0 %v86
    %v88 = vpop.xlane.xlu0 %87
    %v89 = vmax.f32 %v88, 1e-24
    %v90 = vrsqrt.pop %v89
    %v91 = vmul.f32 %v90, %v89
    %v92 = vmul.f32 %v91, %v90
    %v93 = vmul.f32 0.5, %v92
    %v94 = vsub.f32 1.5, %v93
    %v95 = vmul.f32 %v90, %v94
    %vm96 = vweird.f32 %v89
    %vm97 = vweird.f32 %v90
    %vm98 = vmor %vm96, %vm97
    %v99 = vsel %vm98, %v90, %v95
    %v100 = vmul.f32 %v23, %v99
    %vm101 = vcmask 1044224
    %102 = vst.msk [vmem:[#allocation5] sm:$0xf] %vm101, %v100
    // Predicated region
    $region10: #{tpu_custom_call.1} parent=1 // pred_check
      _
    $region11: #{tpu_custom_call.1} parent=1 // pred_check_branch
      %104 = sbr.rel (0) target = $region13
    $region12: #{tpu_custom_call.1} parent=1 // pred_region
      %106 = vsyncadd [#allocation4], 0
      %s108 = sshll.u32 [#allocation5], 4
      %s109 = int_to_ptr.vmem [resolvable:$true] %s108
      %s110 = sshll.u32 %s1, 4
      %s111 = int_to_ptr.hbm [resolvable:$true] %s110
      %113 = dma.vmem_to_hbm [thread:$0]  %s109, 64, %s111, [#allocation4]
    $region13: #{tpu_custom_call.1} parent=1 // pred_fallthru
      _
    // Predicated region
    $region14: #{tpu_custom_call.1} parent=1 // pred_check
      _
    $region15: #{tpu_custom_call.1} parent=1 // pred_check_branch
      %115 = sbr.rel (0) target = $region17
    $region16: #{tpu_custom_call.1} parent=1 // pred_region
      %117 = dma.done [#allocation4], 64
    $region17: #{tpu_custom_call.1} parent=1 // pred_fallthru
      _
    %118 = vsyncpa [#allocation3], 1
    %119 = vsyncpa [#allocation4], 1

</llo_original>
